<compile_context>
chip_gen: v5e
topology: v5e:2x2
jax: 0.10.0
libtpu: 0.0.40
codegen_flags: <defaults>
</compile_context>

<pallas_src>
import math

import jax
import jax.numpy as jnp
from jax.experimental import pallas as pl
from jax.experimental.pallas import tpu as pltpu

_VMEM_CAP = 48 * 1024 * 1024   # leave headroom on v7x (64 MiB physical per TC)


# ---------------------------------------------------------------------------
# Tiling helpers.
# ---------------------------------------------------------------------------
def _choose_tiling(N, D, want):
    """Return (tile_n, R).  tile_n divides N.  R consecutive points are folded
    into one 128-wide lane group (R*D % 128 == 0) when shapes allow it."""
    R = 128 // math.gcd(D, 128)
    if N % R:
        R = 1
    step = 8 * R                        # sublane (8) x lane-group (R) alignment
    want = max(1, min(want, N))
    t = (want // step) * step
    while t >= step:
        if N % t == 0:
            return t, R
        t -= step
    return N, R                         # full-extent tile is always legal


def _vmem_budget_bytes(tile_n, K, D, P, R):
    """Rough VMEM estimate: double-buffered tiles + params + live f32 temps."""
    f4, b2 = 4, 2
    rd = R * D
    g = tile_n // R
    rows = g * K
    io = 2 * (2 * g * rd * f4                    # x in + out (f32)
              + rows * (rd + R * P) * b2)        # fused neighbor|rel stream
    params = 2 * ((5 * rd * rd + (rd + R * P) * 3 * rd) * b2 + 8 * 3 * rd * f4)
    live = rows * rd * f4 * 12 + rows * 3 * rd * f4   # kvp + ~12 (rows, rd) temps
    return io + params + live


def _block_diag(w, R):
    """(a, b) -> (R*a, R*b) with w repeated on the diagonal blocks."""
    a, b = w.shape
    eye = jnp.eye(R, dtype=w.dtype)
    return (eye[:, None, :, None] * w[None, :, None, :]).reshape(R * a, R * b)


# ---------------------------------------------------------------------------
# Glue: kNN + gather.
# TODO(synk): top-k nearest-neighbor selection has no clean Pallas TPU
# equivalent (needs sort/top-k); done in plain JAX.  For large N the full
# O(N^2) distance matrix should itself be tiled / fused.
# ---------------------------------------------------------------------------
def _knn_indices(pos, k):
    d2 = jnp.sum((pos[:, :, None, :] - pos[:, None, :, :]) ** 2, axis=-1)
    _, ind = jax.lax.top_k(-d2, k)
    return ind


def _gather_neighbors(feats, ind):
    # equivalent of idx_pt(pts, idx)
    B, N, K = ind.shape
    idx = ind.reshape(B, N * K)
    out = jnp.take_along_axis(feats, idx[..., None], axis=1)
    return out.reshape(B, N, K, feats.shape[-1])


# ---------------------------------------------------------------------------
# Wrapper calling pallas_call.
# ---------------------------------------------------------------------------
def point_transformer_block(x, pos, params, k, *, tile_n=1024):
    """tile_n: requested N-tile (sweep 1024-2048 for real workloads); it is
    clamped to a divisor of N and auto-reduced to fit the VMEM cap."""
    B, N, D = x.shape
    P = pos.shape[-1]
    K = k

    want = min(tile_n, N)
    if B == 1 and N >= 2:
        want = min(want, N // 2)        # keep >= 2 grid blocks for v7x's 2 TCs
    tn, R = _choose_tiling(N, D, want)
    while _vmem_budget_bytes(tn, K, D, P, R) > _VMEM_CAP:
        nt, nr = _choose_tiling(N, D, tn // 2)
        if nt >= tn:
            break
        tn, R = nt, nr

    RD, RP = R * D, R * P
    G = N // R                           # dense point-groups
    Gt = tn // R                         # groups per tile
    scale = 1.0 / (D ** 0.5)

    # --- neighborhood gather in the lane-dense order -----------------------
    # TODO(synk): for very large N gather the K neighbors in-kernel
    # (PrefetchScalarGridSpec + make_async_copy) instead of materializing the
    # K-expanded stream in HBM; at small D the host gather + bf16 storage wins.
    ind = _knn_indices(pos, k)                                   # (B, N, K)
    idx2 = jnp.transpose(ind.reshape(B, G, R, K), (0, 1, 3, 2))  # (B, G, K, R)
    idx_flat = idx2.reshape(B, G * K * R)

    xk = jnp.take_along_axis(x, idx_flat[..., None], axis=1)     # (B, G*K*R, D)
    xk = xk.reshape(B, G * K, RD)                                # lane-dense
    pos_k = jnp.take_along_axis(pos, idx_flat[..., None], axis=1)
    pos_k = pos_k.reshape(B, G, K, R, P)
    rel = pos.reshape(B, G, R, P)[:, :, None, :, :] - pos_k      # (B, G, K, R, P)
    rel = rel.reshape(B, G * K, RP)
    xr = jnp.concatenate([xk, rel], axis=-1).astype(jnp.bfloat16)  # (B, G*K, RD+RP)

    x_dense = x.reshape(B, G, RD)        # f32 lane-dense residual / store layout

    # --- pack parameters (block-diagonal, bf16 MXU operands) ----------------
    bd = lambda key: _block_diag(params[key], R)
    w_sq = jnp.concatenate([bd("wq"), bd("wm1"), bd("wm2"), bd("wp2"), bd("wf")],
                           axis=0).astype(jnp.bfloat16)          # (5*RD, RD)
    top = jnp.concatenate([bd("wk"), bd("wv"),
                           jnp.zeros((RD, RD), jnp.float32)], axis=1)
    bot = jnp.concatenate([jnp.zeros((RP, 2 * RD), jnp.float32),
                           _block_diag(params["wp1"], R)], axis=1)
    w_nb = jnp.concatenate([top, bot], axis=0).astype(jnp.bfloat16)  # (RD+RP, 3*RD)

    tile_r = lambda key: jnp.tile(params[key], (1, R))           # (1, RD)
    zrow = jnp.zeros((1, RD), jnp.float32)
    b_pack = jnp.concatenate([
        jnp.concatenate([zrow, zrow, tile_r("bp1")], axis=1),          # kvp bias
        jnp.concatenate([tile_r("bm1"), tile_r("bm2"), tile_r("bp2")], axis=1),
        jnp.concatenate([tile_r("bf"), zrow, zrow], axis=1),
        jnp.zeros((5, 3 * RD), jnp.float32)], axis=0)            # (8, 3*RD) f32

    # --- kernel (closes over static scale only) -----------------------------
    def kernel(xd_ref, xr_ref, wsq_ref, wnb_ref, b_ref, o_ref):
        g, rd = xd_ref.shape              # (groups-per-tile, R*D)
        gk = xr_ref.shape[0]              # groups-per-tile * K
        kk = gk // g

        xd = xd_ref[...]                  # f32 residual, lane-dense

        # per-point projections; block-diag weights -> full 128-lane MXU cols
        q = jnp.dot(xd.astype(jnp.bfloat16), wsq_ref[0:rd, :],
                    preferred_element_type=jnp.float32)              # (g, rd)

        # fused k | v | pos-enc-hidden from one matmul over [x_k | rel]
        kvp = jnp.dot(xr_ref[...], wnb_ref[...],
                      preferred_element_type=jnp.float32) + b_ref[0:1, :]
        kf = kvp[:, 0:rd]
        vf = kvp[:, rd:2 * rd]
        peh = jnp.maximum(kvp[:, 2 * rd:3 * rd], 0.0)
        pe = jnp.dot(peh.astype(jnp.bfloat16), wsq_ref[3 * rd:4 * rd, :],
                     preferred_element_type=jnp.float32) + b_ref[1:2, 2 * rd:3 * rd]

        # attention-logit MLP on (q - k + pe); stays flat, no 2D<->3D bounce
        q_rep = jnp.broadcast_to(q[:, None, :], (g, kk, rd)).reshape(gk, rd)
        h = q_rep - kf + pe
        y = jnp.dot(h.astype(jnp.bfloat16), wsq_ref[rd:2 * rd, :],
                    preferred_element_type=jnp.float32) + b_ref[1:2, 0:rd]
        y = jnp.maximum(y, 0.0)
        y = jnp.dot(y.astype(jnp.bfloat16), wsq_ref[2 * rd:3 * rd, :],
                    preferred_element_type=jnp.float32) + b_ref[1:2, rd:2 * rd]
        y = (y * scale).reshape(g, kk, rd)

        # per-channel softmax over the K neighbors (f32; EUP exp + approx recip)
        m = jnp.max(y, axis=1, keepdims=True)
        e = jnp.exp(y - m)
        attn = e * pl.reciprocal(jnp.sum(e, axis=1, keepdims=True), approx=True)

        # weighted sum of (v + pe), final linear, residual; lane-dense store
        z = (vf + pe).reshape(g, kk, rd)
        s = jnp.sum(attn * z, axis=1)                                # (g, rd)
        out = jnp.dot(s.astype(jnp.bfloat16), wsq_ref[4 * rd:5 * rd, :],
                      preferred_element_type=jnp.float32) + b_ref[2:3, 0:rd]
        o_ref[...] = (out + xd).astype(o_ref.dtype)

    # --- pallas_call --------------------------------------------------------
    grid = (B, N // tn)

    def pts(b, i):
        return (b, i, 0)

    def const(b, i):      # grid-invariant params: same block every step
        return (0, 0)

    vmem_limit = int(max(32 * 1024 * 1024,
                         min(_VMEM_CAP, _vmem_budget_bytes(tn, K, D, P, R))))

    n_pts = B * G
    n_nb = n_pts * K
    flops = (2 * n_pts * RD * RD                       # q
             + 2 * n_nb * (RD + RP) * 3 * RD           # fused k|v|pe-hidden
             + 3 * 2 * n_nb * RD * RD                  # pos-enc l2, mid l1/l2
             + 2 * n_pts * RD * RD)                    # final
    bytes_accessed = (2 * n_pts * RD * 4 + n_nb * (RD + RP) * 2
                      + (5 * RD * RD + (RD + RP) * 3 * RD) * 2 + 8 * 3 * RD * 4)
    cost = pl.CostEstimate(flops=int(flops),
                           transcendentals=int(B * N * K * D),
                           bytes_accessed=int(bytes_accessed))

    # NOTE: the const BlockSpecs keep the same block index every step, so
    # Pallas skips re-DMA; pipeline_mode=pl.Buffered(1) would also drop their
    # second buffer if more VMEM headroom is ever needed.
    out = pl.pallas_call(
        kernel,
        out_shape=jax.ShapeDtypeStruct((B, G, RD), x.dtype),
        grid=grid,
        in_specs=[
            pl.BlockSpec((None, Gt, RD), pts),              # x, f32 lane-dense
            pl.BlockSpec((None, Gt * K, RD + RP), pts),     # [x_k | rel], bf16
            pl.BlockSpec((5 * RD, RD), const),              # stacked square W
            pl.BlockSpec((RD + RP, 3 * RD), const),         # fused k|v|pe1 W
            pl.BlockSpec((8, 3 * RD), const),               # packed biases, f32
        ],
        out_specs=pl.BlockSpec((None, Gt, RD), pts),
        compiler_params=pltpu.CompilerParams(
            dimension_semantics=("parallel", "parallel"),
            vmem_limit_bytes=vmem_limit),
        cost_estimate=cost,
    )(x_dense, xr, w_sq, w_nb, b_pack)

    return out.reshape(B, N, D)


# ---------------------------------------------------------------------------
# Deterministic parameter init (shapes as in the PyTorch __init__).
# ---------------------------------------------------------------------------
def init_params(key, dim, pos_dim=3):
    ks = jax.random.split(key, 11)

    def lin_w(k, fan_in, fan_out):
        bound = 1.0 / jnp.sqrt(jnp.float32(fan_in))
        return jax.random.uniform(k, (fan_in, fan_out), jnp.float32, -bound, bound)

    def lin_b(k, fan_in, fan_out):
        bound = 1.0 / jnp.sqrt(jnp.float32(fan_in))
        return jax.random.uniform(k, (1, fan_out), jnp.float32, -bound, bound)

    return dict(
        wq=lin_w(ks[0], dim, dim),
        wk=lin_w(ks[1], dim, dim),
        wv=lin_w(ks[2], dim, dim),
        wm1=lin_w(ks[3], dim, dim), bm1=lin_b(ks[3], dim, dim),
        wm2=lin_w(ks[4], dim, dim), bm2=lin_b(ks[4], dim, dim),
        wp1=lin_w(ks[5], pos_dim, dim), bp1=lin_b(ks[5], pos_dim, dim),
        wp2=lin_w(ks[6], dim, dim), bp2=lin_b(ks[6], dim, dim),
        wf=lin_w(ks[7], dim, dim), bf=lin_b(ks[7], dim, dim),
    )


# ---------------------------------------------------------------------------
# Pure-JAX reference (mirrors the PyTorch forward).  mxu_dtype=bfloat16
# matches the kernel's MXU precision (f32 accumulation); mxu_dtype=float32
# gives the exact PyTorch-f32 math.
# ---------------------------------------------------------------------------
def reference_forward(x, pos, params, k, mxu_dtype=jnp.bfloat16):
    D = x.shape[-1]
    ind = _knn_indices(pos, k)
    x_k = _gather_neighbors(x, ind)
    pos_k = _gather_neighbors(pos, ind)
    rel = pos[:, :, None, :] - pos_k

    def mm(a, w):
        return jnp.dot(a.astype(mxu_dtype), w.astype(mxu_dtype),
                       preferred_element_type=jnp.float32)

    pe = jnp.maximum(mm(rel, params["wp1"]) + params["bp1"][0], 0.0)
    pe = mm(pe, params["wp2"]) + params["bp2"][0]

    q = mm(x, params["wq"])
    kf = mm(x_k, params["wk"])
    vf = mm(x_k, params["wv"])

    h = q[:, :, None, :] - kf + pe
    y = jnp.maximum(mm(h, params["wm1"]) + params["bm1"][0], 0.0)
    y = mm(y, params["wm2"]) + params["bm2"][0]
    y = jax.nn.softmax(y / jnp.sqrt(jnp.float32(D)), axis=-2)

    z = vf + pe
    s = jnp.sum(y * z, axis=-2)
    return mm(s, params["wf"]) + params["bf"][0] + x


if __name__ == "__main__":
    B, N, D, K, P = 2, 16, 32, 8, 3
    key = jax.random.PRNGKey(0)
    kx, kp, kw = jax.random.split(key, 3)
    x = jax.random.normal(kx, (B, N, D), jnp.float32)
    pos = jax.random.normal(kp, (B, N, P), jnp.float32)
    params = init_params(kw, D, P)

    out = point_transformer_block(x, pos, params, K)
    out = jax.block_until_ready(out)

    ref = reference_forward(x, pos, params, K)   # bf16-MXU / f32-acc reference
    assert out.shape == (B, N, D)
    err = float(jnp.max(jnp.abs(out - ref)))
    assert jnp.allclose(out, ref, atol=2e-2, rtol=2e-2), err
    print("KERNEL_OK")
</pallas_src>

<mosaic_0001>
module attributes {stable_mosaic.version = 11 : i64} {
  func.func @kernel(%arg0: i32, %arg1: i32, %arg2: memref<1x4x128xf32, #tpu.memory_space<vmem>>, %arg3: memref<1x32x140xbf16, #tpu.memory_space<vmem>>, %arg4: memref<640x128xbf16, #tpu.memory_space<vmem>>, %arg5: memref<140x384xbf16, #tpu.memory_space<vmem>>, %arg6: memref<8x384xf32, #tpu.memory_space<vmem>>, %arg7: memref<1x4x128xf32, #tpu.memory_space<vmem>>) attributes {dimension_semantics = [#tpu.dimension_semantics<parallel>, #tpu.dimension_semantics<parallel>], iteration_bounds = array<i64: 2, 1>, scalar_prefetch = 0 : i64, scratch_operands = 0 : i64, tpu.core_type = #tpu.core_type<tc>, window_params = [{transform_indices = @transform_0, window_bounds = array<i64: 1, 4, 128>}, {transform_indices = @transform_1, window_bounds = array<i64: 1, 32, 140>}, {pipeline_mode = #tpu.pipeline_mode<synchronous>, transform_indices = @transform_2, window_bounds = array<i64: 640, 128>}, {pipeline_mode = #tpu.pipeline_mode<synchronous>, transform_indices = @transform_3, window_bounds = array<i64: 140, 384>}, {pipeline_mode = #tpu.pipeline_mode<synchronous>, transform_indices = @transform_4, window_bounds = array<i64: 8, 384>}, {transform_indices = @transform_5, window_bounds = array<i64: 1, 4, 128>}]} {
    %c0 = arith.constant 0 : index
    %c0_0 = arith.constant 0 : index
    %c0_1 = arith.constant 0 : index
    %0 = vector.load %arg2[%c0, %c0_0, %c0_1] : memref<1x4x128xf32, #tpu.memory_space<vmem>>, vector<1x4x128xf32>
    %1 = vector.shape_cast %0 : vector<1x4x128xf32> to vector<4x128xf32>
    %2 = arith.truncf %1 : vector<4x128xf32> to vector<4x128xbf16>
    %c0_2 = arith.constant 0 : index
    %c0_3 = arith.constant 0 : index
    %3 = vector.load %arg4[%c0_2, %c0_3] : memref<640x128xbf16, #tpu.memory_space<vmem>>, vector<128x128xbf16>
    %cst = arith.constant dense<0.000000e+00> : vector<4x128xf32>
    %4 = tpu.matmul %2, %3, %cst {dimension_numbers = #tpu.dot_dimension_numbers<[1], [0], [0], [1], [0, 0, 1, 1], [], []>} : vector<4x128xbf16>, vector<128x128xbf16>, vector<4x128xf32> -> vector<4x128xf32>
    %c0_4 = arith.constant 0 : index
    %c0_5 = arith.constant 0 : index
    %c0_6 = arith.constant 0 : index
    %5 = vector.load %arg3[%c0_4, %c0_5, %c0_6] : memref<1x32x140xbf16, #tpu.memory_space<vmem>>, vector<1x32x140xbf16>
    %6 = vector.shape_cast %5 : vector<1x32x140xbf16> to vector<32x140xbf16>
    %c0_7 = arith.constant 0 : index
    %c0_8 = arith.constant 0 : index
    %7 = vector.load %arg5[%c0_7, %c0_8] : memref<140x384xbf16, #tpu.memory_space<vmem>>, vector<140x384xbf16>
    %cst_9 = arith.constant dense<0.000000e+00> : vector<32x384xf32>
    %8 = tpu.matmul %6, %7, %cst_9 {dimension_numbers = #tpu.dot_dimension_numbers<[1], [0], [0], [1], [0, 0, 1, 1], [], []>} : vector<32x140xbf16>, vector<140x384xbf16>, vector<32x384xf32> -> vector<32x384xf32>
    %c0_10 = arith.constant 0 : index
    %c0_11 = arith.constant 0 : index
    %9 = vector.load %arg6[%c0_10, %c0_11] : memref<8x384xf32, #tpu.memory_space<vmem>>, vector<1x384xf32>
    %10 = vector.broadcast %9 : vector<1x384xf32> to vector<32x384xf32>
    %11 = arith.addf %8, %10 : vector<32x384xf32>
    %12 = vector.extract_strided_slice %11 {offsets = [0, 0], sizes = [32, 128], strides = [1, 1]} : vector<32x384xf32> to vector<32x128xf32>
    %13 = vector.extract_strided_slice %11 {offsets = [0, 128], sizes = [32, 128], strides = [1, 1]} : vector<32x384xf32> to vector<32x128xf32>
    %14 = vector.extract_strided_slice %11 {offsets = [0, 256], sizes = [32, 128], strides = [1, 1]} : vector<32x384xf32> to vector<32x128xf32>
    %cst_12 = arith.constant 0.000000e+00 : f32
    %15 = vector.broadcast %cst_12 : f32 to vector<32x128xf32>
    %16 = arith.maximumf %14, %15 : vector<32x128xf32>
    %17 = arith.truncf %16 : vector<32x128xf32> to vector<32x128xbf16>
    %c384 = arith.constant 384 : index
    %c0_13 = arith.constant 0 : index
    %18 = vector.load %arg4[%c384, %c0_13] : memref<640x128xbf16, #tpu.memory_space<vmem>>, vector<128x128xbf16>
    %cst_14 = arith.constant dense<0.000000e+00> : vector<32x128xf32>
    %19 = tpu.matmul %17, %18, %cst_14 {dimension_numbers = #tpu.dot_dimension_numbers<[1], [0], [0], [1], [0, 0, 1, 1], [], []>} : vector<32x128xbf16>, vector<128x128xbf16>, vector<32x128xf32> -> vector<32x128xf32>
    %c1 = arith.constant 1 : index
    %c256 = arith.constant 256 : index
    %20 = vector.load %arg6[%c1, %c256] : memref<8x384xf32, #tpu.memory_space<vmem>>, vector<1x128xf32>
    %21 = vector.broadcast %20 : vector<1x128xf32> to vector<32x128xf32>
    %22 = arith.addf %19, %21 : vector<32x128xf32>
    %23 = vector.shape_cast %4 : vector<4x128xf32> to vector<4x1x128xf32>
    %24 = vector.shape_cast %23 : vector<4x1x128xf32> to vector<4x1x128xf32>
    %25 = vector.broadcast %24 : vector<4x1x128xf32> to vector<4x8x128xf32>
    %26 = vector.shape_cast %25 : vector<4x8x128xf32> to vector<32x128xf32>
    %27 = arith.subf %26, %12 : vector<32x128xf32>
    %28 = arith.addf %27, %22 : vector<32x128xf32>
    %29 = arith.truncf %28 : vector<32x128xf32> to vector<32x128xbf16>
    %c128 = arith.constant 128 : index
    %c0_15 = arith.constant 0 : index
    %30 = vector.load %arg4[%c128, %c0_15] : memref<640x128xbf16, #tpu.memory_space<vmem>>, vector<128x128xbf16>
    %cst_16 = arith.constant dense<0.000000e+00> : vector<32x128xf32>
    %31 = tpu.matmul %29, %30, %cst_16 {dimension_numbers = #tpu.dot_dimension_numbers<[1], [0], [0], [1], [0, 0, 1, 1], [], []>} : vector<32x128xbf16>, vector<128x128xbf16>, vector<32x128xf32> -> vector<32x128xf32>
    %c1_17 = arith.constant 1 : index
    %c0_18 = arith.constant 0 : index
    %32 = vector.load %arg6[%c1_17, %c0_18] : memref<8x384xf32, #tpu.memory_space<vmem>>, vector<1x128xf32>
    %33 = vector.broadcast %32 : vector<1x128xf32> to vector<32x128xf32>
    %34 = arith.addf %31, %33 : vector<32x128xf32>
    %cst_19 = arith.constant 0.000000e+00 : f32
    %35 = vector.broadcast %cst_19 : f32 to vector<32x128xf32>
    %36 = arith.maximumf %34, %35 : vector<32x128xf32>
    %37 = arith.truncf %36 : vector<32x128xf32> to vector<32x128xbf16>
    %c256_20 = arith.constant 256 : index
    %c0_21 = arith.constant 0 : index
    %38 = vector.load %arg4[%c256_20, %c0_21] : memref<640x128xbf16, #tpu.memory_space<vmem>>, vector<128x128xbf16>
    %cst_22 = arith.constant dense<0.000000e+00> : vector<32x128xf32>
    %39 = tpu.matmul %37, %38, %cst_22 {dimension_numbers = #tpu.dot_dimension_numbers<[1], [0], [0], [1], [0, 0, 1, 1], [], []>} : vector<32x128xbf16>, vector<128x128xbf16>, vector<32x128xf32> -> vector<32x128xf32>
    %c1_23 = arith.constant 1 : index
    %c128_24 = arith.constant 128 : index
    %40 = vector.load %arg6[%c1_23, %c128_24] : memref<8x384xf32, #tpu.memory_space<vmem>>, vector<1x128xf32>
    %41 = vector.broadcast %40 : vector<1x128xf32> to vector<32x128xf32>
    %42 = arith.addf %39, %41 : vector<32x128xf32>
    %cst_25 = arith.constant 0.176776692 : f32
    %43 = vector.broadcast %cst_25 : f32 to vector<32x128xf32>
    %44 = arith.mulf %42, %43 : vector<32x128xf32>
    %45 = vector.shape_cast %44 : vector<32x128xf32> to vector<4x8x128xf32>
    %cst_26 = arith.constant dense<0xFF800000> : vector<4x128xf32>
    %46 = vector.multi_reduction <maximumf>, %45, %cst_26 [1] : vector<4x8x128xf32> to vector<4x128xf32>
    %47 = vector.shape_cast %46 : vector<4x128xf32> to vector<4x1x128xf32>
    %48 = vector.broadcast %47 : vector<4x1x128xf32> to vector<4x8x128xf32>
    %49 = arith.subf %45, %48 : vector<4x8x128xf32>
    %50 = math.exp %49 : vector<4x8x128xf32>
    %cst_27 = arith.constant dense<0.000000e+00> : vector<4x128xf32>
    %51 = vector.multi_reduction <add>, %50, %cst_27 [1] : vector<4x8x128xf32> to vector<4x128xf32>
    %52 = vector.shape_cast %51 : vector<4x128xf32> to vector<4x1x128xf32>
    %53 = tpu.reciprocal %52 {approx = true} : vector<4x1x128xf32> -> vector<4x1x128xf32>
    %54 = vector.broadcast %53 : vector<4x1x128xf32> to vector<4x8x128xf32>
    %55 = arith.mulf %50, %54 : vector<4x8x128xf32>
    %56 = arith.addf %13, %22 : vector<32x128xf32>
    %57 = vector.shape_cast %56 : vector<32x128xf32> to vector<4x8x128xf32>
    %58 = arith.mulf %55, %57 : vector<4x8x128xf32>
    %cst_28 = arith.constant dense<0.000000e+00> : vector<4x128xf32>
    %59 = vector.multi_reduction <add>, %58, %cst_28 [1] : vector<4x8x128xf32> to vector<4x128xf32>
    %60 = arith.truncf %59 : vector<4x128xf32> to vector<4x128xbf16>
    %c512 = arith.constant 512 : index
    %c0_29 = arith.constant 0 : index
    %61 = vector.load %arg4[%c512, %c0_29] : memref<640x128xbf16, #tpu.memory_space<vmem>>, vector<128x128xbf16>
    %cst_30 = arith.constant dense<0.000000e+00> : vector<4x128xf32>
    %62 = tpu.matmul %60, %61, %cst_30 {dimension_numbers = #tpu.dot_dimension_numbers<[1], [0], [0], [1], [0, 0, 1, 1], [], []>} : vector<4x128xbf16>, vector<128x128xbf16>, vector<4x128xf32> -> vector<4x128xf32>
    %c2 = arith.constant 2 : index
    %c0_31 = arith.constant 0 : index
    %63 = vector.load %arg6[%c2, %c0_31] : memref<8x384xf32, #tpu.memory_space<vmem>>, vector<1x128xf32>
    %64 = vector.broadcast %63 : vector<1x128xf32> to vector<4x128xf32>
    %65 = arith.addf %62, %64 : vector<4x128xf32>
    %66 = arith.addf %65, %1 : vector<4x128xf32>
    %c0_32 = arith.constant 0 : index
    %c0_33 = arith.constant 0 : index
    %c0_34 = arith.constant 0 : index
    %67 = vector.load %arg7[%c0_32, %c0_33, %c0_34] : memref<1x4x128xf32, #tpu.memory_space<vmem>>, vector<1x4x128xf32>
    %68 = vector.shape_cast %67 : vector<1x4x128xf32> to vector<4x128xf32>
    %69 = vector.shape_cast %66 : vector<4x128xf32> to vector<1x4x128xf32>
    tpu.vector_store %arg7[%c0_32, %c0_33, %c0_34], %69 {strides = array<i32>} : memref<1x4x128xf32, #tpu.memory_space<vmem>>, vector<1x4x128xf32>,
    return
  }
  func.func @transform_0(%arg0: i32, %arg1: i32) -> (i32, i32, i32) {
    %c0_i32 = arith.constant 0 : i32
    %c0_i32_0 = arith.constant 0 : i32
    return %arg0, %arg1, %c0_i32 : i32, i32, i32
  }
  func.func @transform_1(%arg0: i32, %arg1: i32) -> (i32, i32, i32) {
    %c0_i32 = arith.constant 0 : i32
    %c0_i32_0 = arith.constant 0 : i32
    return %arg0, %arg1, %c0_i32 : i32, i32, i32
  }
  func.func @transform_2(%arg0: i32, %arg1: i32) -> (i32, i32) {
    %c0_i32 = arith.constant 0 : i32
    %c0_i32_0 = arith.constant 0 : i32
    %c0_i32_1 = arith.constant 0 : i32
    return %c0_i32, %c0_i32_0 : i32, i32
  }
  func.func @transform_3(%arg0: i32, %arg1: i32) -> (i32, i32) {
    %c0_i32 = arith.constant 0 : i32
    %c0_i32_0 = arith.constant 0 : i32
    %c0_i32_1 = arith.constant 0 : i32
    return %c0_i32, %c0_i32_0 : i32, i32
  }
  func.func @transform_4(%arg0: i32, %arg1: i32) -> (i32, i32) {
    %c0_i32 = arith.constant 0 : i32
    %c0_i32_0 = arith.constant 0 : i32
    %c0_i32_1 = arith.constant 0 : i32
    return %c0_i32, %c0_i32_0 : i32, i32
  }
  func.func @transform_5(%arg0: i32, %arg1: i32) -> (i32, i32, i32) {
    %c0_i32 = arith.constant 0 : i32
    %c0_i32_0 = arith.constant 0 : i32
    return %arg0, %arg1, %c0_i32 : i32, i32, i32
  }
}

</mosaic_0001>

<llo_original>
// kernel: tpu_custom_call.1
$region0: #{tpu_custom_call.1}
  #allocation0 [shape = 'u32[]', space=smem, size = 0x4, offset = 0x4, fixed_abs, tag = 'smem constant byte address 0x4 - core index']
  #allocation1 [shape = 'u32[72,128]{1,0:T(1,128)}', space=vmem, size = 0x9000, scoped, tag = 'internal scratch']
  %s0 = inlined_call_operand.hbm [shape: f32[2,4,128], index: 0, kind: input, shape index: {}]
  %s1 = inlined_call_operand.hbm [shape: bf16[2,32,140], index: 1, kind: input, shape index: {}]
  %s2 = inlined_call_operand.hbm [shape: bf16[640,128], index: 2, kind: input, shape index: {}]
  %s3 = inlined_call_operand.hbm [shape: bf16[140,384], index: 3, kind: input, shape index: {}]
  %s4 = inlined_call_operand.hbm [shape: f32[8,384], index: 4, kind: input, shape index: {}]
  %s5 = inlined_call_operand.hbm [shape: f32[2,4,128], index: 5, kind: output, shape index: {}]
  %s6 = sld [smem:[#allocation0]]
  $region73: #{tpu_custom_call.1} parent=0
    _
  %s8 = ssub.s32 1, %s6
  %s9 = scalar_select 0, %s8, %s6
  $region1: #{tpu_custom_call.1} parent=0
    #allocation2 [shape = 'u8[4096]{0}', space=vmem, size = 0x1000, scoped, tag = 'input window, operand 0']
    #allocation3 [shape = 's32[2]{0}', space=sflag, size = 0x8, scoped, tag = 'scoped memory for tpu_custom_call.1']
    #allocation4 [shape = 's32[2]{0}', space=sflag, size = 0x8, scoped, tag = 'scoped memory for tpu_custom_call.1']
    #allocation5 [shape = 'u8[32768]{0}', space=vmem, size = 0x8000, scoped, tag = 'input window, operand 1']
    #allocation6 [shape = 's32[2]{0}', space=sflag, size = 0x8, scoped, tag = 'scoped memory for tpu_custom_call.1']
    #allocation7 [shape = 'u8[163840]{0}', space=vmem, size = 0x28000, scoped, tag = 'input window, operand 2, single buffered']
    #allocation8 [shape = 'u8[110592]{0}', space=vmem, size = 0x1b000, scoped, tag = 'input window, operand 3, single buffered']
    #allocation9 [shape = 's32[1]{0}', space=sflag, size = 0x4, scoped, tag = 'scoped memory for tpu_custom_call.1']
    #allocation10 [shape = 'u8[12288]{0}', space=vmem, size = 0x3000, scoped, tag = 'input window, operand 4, single buffered']
    #allocation11 [shape = 'u8[4096]{0}', space=vmem, size = 0x1000, scoped, tag = 'output window, operand 0']
    %10 = vsyncpa [#allocation3], 0
    %s11 = scalar_lea.sflag [#allocation3], 1
    %12 = vsyncpa %s11, 0
    %13 = vsyncpa [#allocation6], 0
    %s14 = scalar_lea.sflag [#allocation6], 1
    %15 = vsyncpa %s14, 0
    %16 = vsyncpa [#allocation9], 0
    %17 = vsyncpa [#allocation4], 0
    %s18 = scalar_lea.sflag [#allocation4], 1
    %19 = vsyncpa %s18, 0
    loop: start=0, step=1, limit=4
    $region2: #{tpu_custom_call.1} parent=1 // loop_pre_header
      _
    $region3: #{tpu_custom_call.1} parent=1 // loop_header
      %s21 = sphi 0, %s25
      %p22 = scmp.ge.s32.totalorder %s21, 4
      %s28 = sphi 0, %s40
      %s29 = sphi 0, %s36
      %s30 = sphi 0, %s28
      %s31 = sphi 0, %s29
      %s32 = sphi 0, %s30
      %s33 = sphi 0, %s31
      %s45 = sphi 0, %s47
      %s48 = sphi 0, %s45
      %s49 = sphi 0, %s48
      %s65 = sphi 0, %s49
      %s73 = sphi 0, %s75
      %s76 = sphi 0, %s73
      %s77 = sphi 0, %s76
      %s93 = sphi 0, %s77
      %s97 = sphi 0, %s97
      %s99 = sphi 0, %s97
      %s100 = sphi 0, %s99
      %s114 = sphi 0, %s100
      %s118 = sphi 0, %s118
      %s120 = sphi 0, %s118
      %s121 = sphi 0, %s120
      %s135 = sphi 0, %s121
      %s139 = sphi 0, %s139
      %s141 = sphi 0, %s139
      %s142 = sphi 0, %s141
      %s156 = sphi 0, %s142
      %s164 = sphi 0, %s166
      %s167 = sphi 0, %s164
      %s168 = sphi 0, %s167
      %s184 = sphi 0, %s168
    $region4: #{tpu_custom_call.1} parent=1 // loop_header_branch
      %24 = sbr.rel (%p22) target = $region8
    $region5: #{tpu_custom_call.1} parent=1 // loop_body
      %s26 = ssub.s32 %s21, 1
      %s27 = ssub.s32 %s21, 2
      %s34 = sadd.s32 1, %s29
      %p35 = scmp.ge.s32.totalorder %s34, 1
      %s36 = scalar_select %p35, 0, %s34
      %s37 = sadd.s32 1, %s28
      %s38 = scalar_select %p35, %s37, %s28
      %p39 = scmp.ge.s32.totalorder %s38, 2
      %s40 = scalar_select %p39, 0, %s38
      %s41 = ssub.s32 %s28, %s40
      %s42 = ssub.s32 %s29, %s36
      %s43 = sor.u32 %s41, %s42
      %p44 = scmp.eq.s32.totalorder %s43, 0
      %s46 = sadd.s32 %s45, 1
      %s47 = scalar_select %p44, %s45, %s46
      %p50 = pneg %p44
      %p51 = scmp.eq.s32.totalorder %s21, 1
      %p52 = por %p50, %p51
      %p53 = scmp.ne.s32.totalorder %s45, %s48
      %p54 = scmp.eq.s32.totalorder %s21, 0
      %p55 = por %p53, %p54
      %p56 = scmp.ne.s32.totalorder %s45, %s48
      %p57 = scmp.eq.s32.totalorder %s26, 1
      %p58 = por %p56, %p57
      %p59 = scmp.ne.s32.totalorder %s48, %s49
      %p60 = scmp.eq.s32.totalorder %s26, 0
      %p61 = por %p59, %p60
      %p62 = scmp.ne.s32.totalorder %s48, %s49
      %p63 = scmp.eq.s32.totalorder %s27, 1
      %p64 = por %p62, %p63
      %p66 = scmp.ne.s32.totalorder %s49, %s65
      %p67 = scmp.eq.s32.totalorder %s27, 0
      %p68 = por %p66, %p67
      %s69 = ssub.s32 %s28, %s40
      %s70 = ssub.s32 %s29, %s36
      %s71 = sor.u32 %s69, %s70
      %p72 = scmp.eq.s32.totalorder %s71, 0
      %s74 = sadd.s32 %s73, 1
      %s75 = scalar_select %p72, %s73, %s74
      %p78 = pneg %p72
      %p79 = scmp.eq.s32.totalorder %s21, 1
      %p80 = por %p78, %p79
      %p81 = scmp.ne.s32.totalorder %s73, %s76
      %p82 = scmp.eq.s32.totalorder %s21, 0
      %p83 = por %p81, %p82
      %p84 = scmp.ne.s32.totalorder %s73, %s76
      %p85 = scmp.eq.s32.totalorder %s26, 1
      %p86 = por %p84, %p85
      %p87 = scmp.ne.s32.totalorder %s76, %s77
      %p88 = scmp.eq.s32.totalorder %s26, 0
      %p89 = por %p87, %p88
      %p90 = scmp.ne.s32.totalorder %s76, %s77
      %p91 = scmp.eq.s32.totalorder %s27, 1
      %p92 = por %p90, %p91
      %p94 = scmp.ne.s32.totalorder %s77, %s93
      %p95 = scmp.eq.s32.totalorder %s27, 0
      %p96 = por %p94, %p95
      %s98 = sadd.s32 %s97, 1
      %p101 = scmp.eq.s32.totalorder %s21, 1
      %p102 = scmp.ne.s32.totalorder %s97, %s99
      %p103 = scmp.eq.s32.totalorder %s21, 0
      %p104 = por %p102, %p103
      %p105 = scmp.ne.s32.totalorder %s97, %s99
      %p106 = scmp.eq.s32.totalorder %s26, 1
      %p107 = por %p105, %p106
      %p108 = scmp.ne.s32.totalorder %s99, %s100
      %p109 = scmp.eq.s32.totalorder %s26, 0
      %p110 = por %p108, %p109
      %p111 = scmp.ne.s32.totalorder %s99, %s100
      %p112 = scmp.eq.s32.totalorder %s27, 1
      %p113 = por %p111, %p112
      %p115 = scmp.ne.s32.totalorder %s100, %s114
      %p116 = scmp.eq.s32.totalorder %s27, 0
      %p117 = por %p115, %p116
      %s119 = sadd.s32 %s118, 1
      %p122 = scmp.eq.s32.totalorder %s21, 1
      %p123 = scmp.ne.s32.totalorder %s118, %s120
      %p124 = scmp.eq.s32.totalorder %s21, 0
      %p125 = por %p123, %p124
      %p126 = scmp.ne.s32.totalorder %s118, %s120
      %p127 = scmp.eq.s32.totalorder %s26, 1
      %p128 = por %p126, %p127
      %p129 = scmp.ne.s32.totalorder %s120, %s121
      %p130 = scmp.eq.s32.totalorder %s26, 0
      %p131 = por %p129, %p130
      %p132 = scmp.ne.s32.totalorder %s120, %s121
      %p133 = scmp.eq.s32.totalorder %s27, 1
      %p134 = por %p132, %p133
      %p136 = scmp.ne.s32.totalorder %s121, %s135
      %p137 = scmp.eq.s32.totalorder %s27, 0
      %p138 = por %p136, %p137
      %s140 = sadd.s32 %s139, 1
      %p143 = scmp.eq.s32.totalorder %s21, 1
      %p144 = scmp.ne.s32.totalorder %s139, %s141
      %p145 = scmp.eq.s32.totalorder %s21, 0
      %p146 = por %p144, %p145
      %p147 = scmp.ne.s32.totalorder %s139, %s141
      %p148 = scmp.eq.s32.totalorder %s26, 1
      %p149 = por %p147, %p148
      %p150 = scmp.ne.s32.totalorder %s141, %s142
      %p151 = scmp.eq.s32.totalorder %s26, 0
      %p152 = por %p150, %p151
      %p153 = scmp.ne.s32.totalorder %s141, %s142
      %p154 = scmp.eq.s32.totalorder %s27, 1
      %p155 = por %p153, %p154
      %p157 = scmp.ne.s32.totalorder %s142, %s156
      %p158 = scmp.eq.s32.totalorder %s27, 0
      %p159 = por %p157, %p158
      %s160 = ssub.s32 %s28, %s40
      %s161 = ssub.s32 %s29, %s36
      %s162 = sor.u32 %s160, %s161
      %p163 = scmp.eq.s32.totalorder %s162, 0
      %s165 = sadd.s32 %s164, 1
      %s166 = scalar_select %p163, %s164, %s165
      %p169 = pneg %p163
      %p170 = scmp.eq.s32.totalorder %s21, 1
      %p171 = por %p169, %p170
      %p172 = scmp.ne.s32.totalorder %s164, %s167
      %p173 = scmp.eq.s32.totalorder %s21, 0
      %p174 = por %p172, %p173
      %p175 = scmp.ne.s32.totalorder %s164, %s167
      %p176 = scmp.eq.s32.totalorder %s26, 1
      %p177 = por %p175, %p176
      %p178 = scmp.ne.s32.totalorder %s167, %s168
      %p179 = scmp.eq.s32.totalorder %s26, 0
      %p180 = por %p178, %p179
      %p181 = scmp.ne.s32.totalorder %s167, %s168
      %p182 = scmp.eq.s32.totalorder %s27, 1
      %p183 = por %p181, %p182
      %p185 = scmp.ne.s32.totalorder %s168, %s184
      %p186 = scmp.eq.s32.totalorder %s27, 0
      %p187 = por %p185, %p186
      %p188 = scmp.le.s32.totalorder 1, %s21
      %p189 = scmp.lt.s32.totalorder %s21, 3
      %p190 = pnand %p188, %p189
      %p191 = pneg %p190
      // Predicated region
      $region9: #{tpu_custom_call.1} parent=5 // pred_check
        _
      $region10: #{tpu_custom_call.1} parent=5 // pred_check_branch
        %193 = sbr.rel (%p190) target = $region12
      $region11: #{tpu_custom_call.1} parent=5 // pred_region
        %s194 = ssub.s32 %s21, 1
        // Predicated region
        $region13: #{tpu_custom_call.1} parent=11 // pred_check
          %p195 = pneg %p110
        $region14: #{tpu_custom_call.1} parent=11 // pred_check_branch
          %197 = sbr.rel (%p195) target = $region16
        $region15: #{tpu_custom_call.1} parent=11 // pred_region
          %199 = vsyncadd [#allocation6], 0
          %s200 = sshll.u32 %s2, 4
          %s201 = int_to_ptr.hbm [resolvable:$true] %s200
          %s202 = sshll.u32 [#allocation7], 4
          %s203 = int_to_ptr.vmem [resolvable:$true] %s202
          %208 = dma.hbm_to_vmem [thread:$0]  %s201, 5120, %s203, [#allocation6], 64, 64, 4
        $region16: #{tpu_custom_call.1} parent=11 // pred_fallthru
          _
        // Predicated region
        $region17: #{tpu_custom_call.1} parent=11 // pred_check
          %p209 = pneg %p131
        $region18: #{tpu_custom_call.1} parent=11 // pred_check_branch
          %211 = sbr.rel (%p209) target = $region20
        $region19: #{tpu_custom_call.1} parent=11 // pred_region
          %213 = vsyncadd [#allocation9], 0
          %s214 = sshll.u32 %s3, 4
          %s215 = int_to_ptr.hbm [resolvable:$true] %s214
          %s216 = sshll.u32 [#allocation8], 4
          %s217 = int_to_ptr.vmem [resolvable:$true] %s216
          %222 = dma.hbm_to_vmem [thread:$0]  %s215, 3456, %s217, [#allocation9], 192, 192, 12
        $region20: #{tpu_custom_call.1} parent=11 // pred_fallthru
          _
        // Predicated region
        $region21: #{tpu_custom_call.1} parent=11 // pred_check
          %p223 = pneg %p152
        $region22: #{tpu_custom_call.1} parent=11 // pred_check_branch
          %225 = sbr.rel (%p223) target = $region24
        $region23: #{tpu_custom_call.1} parent=11 // pred_region
          %227 = vsyncadd [#allocation9], 0
          %s229 = sshll.u32 %s4, 4
          %s230 = int_to_ptr.hbm [resolvable:$true] %s229
          %s231 = sshll.u32 [#allocation10], 4
          %s232 = int_to_ptr.vmem [resolvable:$true] %s231
          %234 = dma.hbm_to_vmem [thread:$0]  %s230, 384, %s232, [#allocation9]
        $region24: #{tpu_custom_call.1} parent=11 // pred_fallthru
          _
      $region12: #{tpu_custom_call.1} parent=5 // pred_fallthru
        _
      %p235 = scmp.lt.s32.totalorder %s21, 2
      // Predicated region
      $region25: #{tpu_custom_call.1} parent=5 // pred_check
        %p236 = pneg %p235
      $region26: #{tpu_custom_call.1} parent=5 // pred_check_branch
        %238 = sbr.rel (%p236) target = $region28
      $region27: #{tpu_custom_call.1} parent=5 // pred_region
        // Predicated region
        $region29: #{tpu_custom_call.1} parent=27 // pred_check
          %p239 = pneg %p55
        $region30: #{tpu_custom_call.1} parent=27 // pred_check_branch
          %241 = sbr.rel (%p239) target = $region32
        $region31: #{tpu_custom_call.1} parent=27 // pred_region
          %s242 = sand.u32 %s45, 1
          %s243 = scalar_lea.sflag [#allocation3], %s242
          %s244 = sand.u32 %s45, 1
          %s245 = smul.addr %s244, 4
          %s246 = scalar_lea.vmem [#allocation2], %s245
          %248 = vsyncadd %s243, 0
          %s249 = sadd.s32 %s29, %s28
          %s250 = smul.addr %s249, 4
          %s251 = scalar_lea.hbm %s0, %s250
          %s253 = sshll.u32 %s251, 4
          %s254 = int_to_ptr.hbm [resolvable:$true] %s253
          %s255 = sshll.u32 %s246, 4
          %s256 = int_to_ptr.vmem [resolvable:$true] %s255
          %258 = dma.hbm_to_vmem [thread:$0]  %s254, 64, %s256, %s243
        $region32: #{tpu_custom_call.1} parent=27 // pred_fallthru
          _
        // Predicated region
        $region33: #{tpu_custom_call.1} parent=27 // pred_check
          %p259 = pneg %p83
        $region34: #{tpu_custom_call.1} parent=27 // pred_check_branch
          %261 = sbr.rel (%p259) target = $region36
        $region35: #{tpu_custom_call.1} parent=27 // pred_region
          %s262 = sand.u32 %s21, 1
          %s263 = scalar_lea.sflag [#allocation6], %s262
          %s264 = sand.u32 %s73, 1
          %s265 = smul.addr %s264, 32
          %s266 = scalar_lea.vmem [#allocation5], %s265
          %s267 = smul.u32 4, %s29
          %269 = vsyncadd %s263, 0
          %s270 = smul.addr %s267, 2
          %s271 = smul.addr %s28, 8
          %s272 = sadd.s32 %s270, %s271
          %s273 = smul.addr %s272, 4
          %s274 = scalar_lea.hbm %s1, %s273
          %s275 = sshll.u32 %s274, 4
          %s276 = int_to_ptr.hbm [resolvable:$true] %s275
          %s277 = sshll.u32 %s266, 4
          %s278 = int_to_ptr.vmem [resolvable:$true] %s277
          %283 = dma.hbm_to_vmem [thread:$0]  %s276, 512, %s278, %s263, 128, 128, 8
        $region36: #{tpu_custom_call.1} parent=27 // pred_fallthru
          _
      $region28: #{tpu_custom_call.1} parent=5 // pred_fallthru
        _
      %p284 = scmp.le.s32.totalorder 1, %s21
      %p285 = scmp.lt.s32.totalorder %s21, 3
      %p286 = pnand %p284, %p285
      %p287 = pneg %p286
      // Predicated region
      $region37: #{tpu_custom_call.1} parent=5 // pred_check
        _
      $region38: #{tpu_custom_call.1} parent=5 // pred_check_branch
        %289 = sbr.rel (%p286) target = $region40
      $region39: #{tpu_custom_call.1} parent=5 // pred_region
        %s290 = ssub.s32 %s21, 1
        %s291 = sand.u32 %s48, 1
        %s292 = scalar_lea.sflag [#allocation3], %s291
        %s293 = sand.u32 %s48, 1
        %s294 = smul.addr %s293, 4
        %s295 = scalar_lea.vmem [#allocation2], %s294
        // Predicated region
        $region41: #{tpu_custom_call.1} parent=39 // pred_check
          %p296 = pneg %p61
        $region42: #{tpu_custom_call.1} parent=39 // pred_check_branch
          %298 = sbr.rel (%p296) target = $region44
        $region43: #{tpu_custom_call.1} parent=39 // pred_region
          %300 = dma.done %s292, 64
        $region44: #{tpu_custom_call.1} parent=39 // pred_fallthru
          _
        %s301 = sand.u32 %s26, 1
        %s302 = scalar_lea.sflag [#allocation6], %s301
        %s303 = sand.u32 %s76, 1
        %s304 = smul.addr %s303, 32
        %s305 = scalar_lea.vmem [#allocation5], %s304
        // Predicated region
        $region45: #{tpu_custom_call.1} parent=39 // pred_check
          %p306 = pneg %p89
        $region46: #{tpu_custom_call.1} parent=39 // pred_check_branch
          %308 = sbr.rel (%p306) target = $region48
        $region47: #{tpu_custom_call.1} parent=39 // pred_region
          %310 = dma.done %s302, 512
        $region48: #{tpu_custom_call.1} parent=39 // pred_fallthru
          _
        // Predicated region
        $region49: #{tpu_custom_call.1} parent=39 // pred_check
          %p311 = pneg %p110
        $region50: #{tpu_custom_call.1} parent=39 // pred_check_branch
          %313 = sbr.rel (%p311) target = $region52
        $region51: #{tpu_custom_call.1} parent=39 // pred_region
          %315 = dma.done [#allocation6], 5120
        $region52: #{tpu_custom_call.1} parent=39 // pred_fallthru
          _
        // Predicated region
        $region53: #{tpu_custom_call.1} parent=39 // pred_check
          %p316 = pneg %p131
        $region54: #{tpu_custom_call.1} parent=39 // pred_check_branch
          %318 = sbr.rel (%p316) target = $region56
        $region55: #{tpu_custom_call.1} parent=39 // pred_region
          %320 = dma.done [#allocation9], 3456
        $region56: #{tpu_custom_call.1} parent=39 // pred_fallthru
          _
        // Predicated region
        $region57: #{tpu_custom_call.1} parent=39 // pred_check
          %p321 = pneg %p152
        $region58: #{tpu_custom_call.1} parent=39 // pred_check_branch
          %323 = sbr.rel (%p321) target = $region60
        $region59: #{tpu_custom_call.1} parent=39 // pred_region
          %325 = dma.done [#allocation9], 384
        $region60: #{tpu_custom_call.1} parent=39 // pred_fallthru
          _
        %s326 = sand.u32 %s48, 1
        %s327 = scalar_lea.sflag [#allocation3], %s326
        %s328 = sand.u32 %s48, 1
        %s329 = smul.addr %s328, 4
        %s330 = scalar_lea.vmem [#allocation2], %s329
        %p331 = pneg %p61
        %p332 = pneg %p58
        %s333 = sand.u32 %s26, 1
        %s334 = scalar_lea.sflag [#allocation6], %s333
        %s335 = sand.u32 %s76, 1
        %s336 = smul.addr %s335, 32
        %s337 = scalar_lea.vmem [#allocation5], %s336
        %p338 = pneg %p89
        %p339 = pneg %p86
        %p340 = pneg %p110
        %p341 = pneg %p107
        %p342 = pneg %p131
        %p343 = pneg %p128
        %p344 = pneg %p152
        %p345 = pneg %p149
        %p346 = pneg %p180
        %p347 = pneg %p177
        %s348 = sand.u32 %s167, 1
        %s349 = scalar_lea.sflag [#allocation4], %s348
        %s350 = sand.u32 %s167, 1
        %s351 = smul.addr %s350, 4
        %s352 = scalar_lea.vmem [#allocation11], %s351
        %s353 = smul.u32 4, %s31
        %v355 = vld [vmem:[%s295] sm:$0xf]
        %v356 = vpack.c.bf16 %v355, %v355
        %v357 = vld [vmem:[#allocation7] sm:$0xf]
        %v358 = vld [vmem:[#allocation7 + $0x4] sm:$0xf]
        %v359 = vld [vmem:[#allocation7 + $0x8] sm:$0xf]
        %v360 = vld [vmem:[#allocation7 + $0xc] sm:$0xf]
        %v361 = vld [vmem:[#allocation7 + $0x10] sm:$0xf]
        %v362 = vld [vmem:[#allocation7 + $0x14] sm:$0xf]
        %v363 = vld [vmem:[#allocation7 + $0x18] sm:$0xf]
        %v364 = vld [vmem:[#allocation7 + $0x1c] sm:$0xf]
        %v365 = vld [vmem:[#allocation7 + $0x20] sm:$0xf]
        %v366 = vld [vmem:[#allocation7 + $0x24] sm:$0xf]
        %v367 = vld [vmem:[#allocation7 + $0x28] sm:$0xf]
        %v368 = vld [vmem:[#allocation7 + $0x2c] sm:$0xf]
        %v369 = vld [vmem:[#allocation7 + $0x30] sm:$0xf]
        %v370 = vld [vmem:[#allocation7 + $0x34] sm:$0xf]
        %v371 = vld [vmem:[#allocation7 + $0x38] sm:$0xf]
        %v372 = vld [vmem:[#allocation7 + $0x3c] sm:$0xf]
        %v389 = vunpack.c.l.b16 %v357
        %v390 = vunpack.c.l.b16 %v358
        %v391 = vunpack.c.l.b16 %v359
        %v392 = vunpack.c.l.b16 %v360
        %v393 = vunpack.c.l.b16 %v361
        %v394 = vunpack.c.l.b16 %v362
        %v395 = vunpack.c.l.b16 %v363
        %v396 = vunpack.c.l.b16 %v364
        %v397 = vunpack.c.l.b16 %v365
        %v398 = vunpack.c.l.b16 %v366
        %v399 = vunpack.c.l.b16 %v367
        %v400 = vunpack.c.l.b16 %v368
        %v401 = vunpack.c.l.b16 %v369
        %v402 = vunpack.c.l.b16 %v370
        %v403 = vunpack.c.l.b16 %v371
        %v404 = vunpack.c.l.b16 %v372
        %v405 = vpack.c.b16 %v390, %v389
        %v406 = vpack.c.b16 %v392, %v391
        %v407 = vpack.c.b16 %v394, %v393
        %v408 = vpack.c.b16 %v396, %v395
        %v409 = vpack.c.b16 %v398, %v397
        %v410 = vpack.c.b16 %v400, %v399
        %v411 = vpack.c.b16 %v402, %v401
        %v412 = vpack.c.b16 %v404, %v403
        %421 = vmatpush.bf16.msra.mxu0 %v412
        %422 = vmatpush.bf16.msra.mxu0 %v411
        %423 = vmatpush.bf16.msra.mxu0 %v410
        %424 = vmatpush.bf16.msra.mxu0 %v409
        %425 = vmatpush.bf16.msra.mxu0 %v408
        %426 = vmatpush.bf16.msra.mxu0 %v407
        %427 = vmatpush.bf16.msra.mxu0 %v406
        %428 = vmatpush.bf16.msra.mxu0 %v405
        %429 = vmatmul.bf16.gmra.mxu0 %v356
        %v430 = vpop.f32.mrf.mxu0
        %v431 = vadd.f32 0.0, %v430
        %v432 = vpop.f32.mrf.mxu0
        %433 = vdwg.mxu0
        %v434 = vld [vmem:[%s305] sm:$0xff]
        %v435 = vld [vmem:[%s305 + $0x8] sm:$0xff]
        %v436 = vld [vmem:[%s305 + $0x10] sm:$0xff]
        %v437 = vld [vmem:[%s305 + $0x18] sm:$0xff]
        %v438 = vld [vmem:[#allocation8] sm:$0xff]
        %v439 = vld [vmem:[#allocation8 + $0x8] sm:$0xf]
        %v440 = vld [vmem:[#allocation8 + $0xc] sm:$0xff]
        %v441 = vld [vmem:[#allocation8 + $0x14] sm:$0xf]
        %v442 = vld [vmem:[#allocation8 + $0x18] sm:$0xff]
        %v443 = vld [vmem:[#allocation8 + $0x20] sm:$0xf]
        %v444 = vld [vmem:[#allocation8 + $0x24] sm:$0xff]
        %v445 = vld [vmem:[#allocation8 + $0x2c] sm:$0xf]
        %v446 = vld [vmem:[#allocation8 + $0x30] sm:$0xff]
        %v447 = vld [vmem:[#allocation8 + $0x38] sm:$0xf]
        %v448 = vld [vmem:[#allocation8 + $0x3c] sm:$0xff]
        %v449 = vld [vmem:[#allocation8 + $0x44] sm:$0xf]
        %v450 = vld [vmem:[#allocation8 + $0x48] sm:$0xff]
        %v451 = vld [vmem:[#allocation8 + $0x50] sm:$0xf]
        %v452 = vld [vmem:[#allocation8 + $0x54] sm:$0xff]
        %v453 = vld [vmem:[#allocation8 + $0x5c] sm:$0xf]
        %v454 = vld [vmem:[#allocation8 + $0x60] sm:$0xff]
        %v455 = vld [vmem:[#allocation8 + $0x68] sm:$0xf]
        %v456 = vld [vmem:[#allocation8 + $0x6c] sm:$0xff]
        %v457 = vld [vmem:[#allocation8 + $0x74] sm:$0xf]
        %v458 = vld [vmem:[#allocation8 + $0x78] sm:$0xff]
        %v459 = vld [vmem:[#allocation8 + $0x80] sm:$0xf]
        %v460 = vld [vmem:[#allocation8 + $0x84] sm:$0xff]
        %v461 = vld [vmem:[#allocation8 + $0x8c] sm:$0xf]
        %v462 = vld [vmem:[#allocation8 + $0x90] sm:$0xff]
        %v463 = vld [vmem:[#allocation8 + $0x98] sm:$0xf]
        %v464 = vld [vmem:[#allocation8 + $0x9c] sm:$0xff]
        %v465 = vld [vmem:[#allocation8 + $0xa4] sm:$0xf]
        %v466 = vld [vmem:[#allocation8 + $0xa8] sm:$0xff]
        %v467 = vld [vmem:[#allocation8 + $0xb0] sm:$0xf]
        %v468 = vld [vmem:[#allocation8 + $0xb4] sm:$0xff]
        %v469 = vld [vmem:[#allocation8 + $0xbc] sm:$0xf]
        %v470 = vld [vmem:[#allocation8 + $0xc0] sm:$0xff]
        %v471 = vld [vmem:[#allocation8 + $0xc8] sm:$0xf]
        %v472 = vld [vmem:[#allocation8 + $0xcc] sm:$0x33]
        %v473 = vld [vmem:[#allocation8 + $0xd4] sm:$0x3]
        %v474 = vld [vmem:[#allocation10] ss:$8 sm:$0x7]
        %v476 = vperm.slane %v474, 0
        %v477 = vperm.slane %v474, 1
        %v478 = vperm.slane %v474, 2
        %v486 = vunpack.c.l.b16 %v434
        %v487 = vunpack.c.h.b16 %v434
        %v488 = vunpack.c.l.b16 %v435
        %v489 = vunpack.c.h.b16 %v435
        %v490 = vunpack.c.l.b16 %v436
        %v491 = vunpack.c.h.b16 %v436
        %v492 = vunpack.c.l.b16 %v437
        %v493 = vunpack.c.h.b16 %v437
        %v494 = vpack.c.b16 %v488, %v486
        %v495 = vpack.c.b16 %v489, %v487
        %v496 = vpack.c.b16 %v492, %v490
        %v497 = vpack.c.b16 %v493, %v491
        %v536 = vunpack.c.l.b16 %v438
        %v537 = vunpack.c.h.b16 %v438
        %v538 = vunpack.c.l.b16 %v439
        %v539 = vunpack.c.l.b16 %v440
        %v540 = vunpack.c.h.b16 %v440
        %v541 = vunpack.c.l.b16 %v441
        %v542 = vunpack.c.l.b16 %v442
        %v543 = vunpack.c.h.b16 %v442
        %v544 = vunpack.c.l.b16 %v443
        %v545 = vunpack.c.l.b16 %v444
        %v546 = vunpack.c.h.b16 %v444
        %v547 = vunpack.c.l.b16 %v445
        %v548 = vunpack.c.l.b16 %v446
        %v549 = vunpack.c.h.b16 %v446
        %v550 = vunpack.c.l.b16 %v447
        %v551 = vunpack.c.l.b16 %v448
        %v552 = vunpack.c.h.b16 %v448
        %v553 = vunpack.c.l.b16 %v449
        %v554 = vunpack.c.l.b16 %v450
        %v555 = vunpack.c.h.b16 %v450
        %v556 = vunpack.c.l.b16 %v451
        %v557 = vunpack.c.l.b16 %v452
        %v558 = vunpack.c.h.b16 %v452
        %v559 = vunpack.c.l.b16 %v453
        %v560 = vunpack.c.l.b16 %v454
        %v561 = vunpack.c.h.b16 %v454
        %v562 = vunpack.c.l.b16 %v455
        %v563 = vunpack.c.l.b16 %v456
        %v564 = vunpack.c.h.b16 %v456
        %v565 = vunpack.c.l.b16 %v457
        %v566 = vunpack.c.l.b16 %v458
        %v567 = vunpack.c.h.b16 %v458
        %v568 = vunpack.c.l.b16 %v459
        %v569 = vunpack.c.l.b16 %v460
        %v570 = vunpack.c.h.b16 %v460
        %v571 = vunpack.c.l.b16 %v461
        %v572 = vunpack.c.l.b16 %v462
        %v573 = vunpack.c.h.b16 %v462
        %v574 = vunpack.c.l.b16 %v463
        %v575 = vunpack.c.l.b16 %v464
        %v576 = vunpack.c.h.b16 %v464
        %v577 = vunpack.c.l.b16 %v465
        %v578 = vunpack.c.l.b16 %v466
        %v579 = vunpack.c.h.b16 %v466
        %v580 = vunpack.c.l.b16 %v467
        %v581 = vunpack.c.l.b16 %v468
        %v582 = vunpack.c.h.b16 %v468
        %v583 = vunpack.c.l.b16 %v469
        %v584 = vunpack.c.l.b16 %v470
        %v585 = vunpack.c.h.b16 %v470
        %v586 = vunpack.c.l.b16 %v471
        %v587 = vunpack.c.l.b16 %v472
        %v588 = vunpack.c.h.b16 %v472
        %v589 = vunpack.c.l.b16 %v473
        %v590 = vpack.c.b16 %v539, %v536
        %v591 = vpack.c.b16 %v540, %v537
        %v592 = vpack.c.b16 %v541, %v538
        %v593 = vpack.c.b16 %v545, %v542
        %v594 = vpack.c.b16 %v546, %v543
        %v595 = vpack.c.b16 %v547, %v544
        %v596 = vpack.c.b16 %v551, %v548
        %v597 = vpack.c.b16 %v552, %v549
        %v598 = vpack.c.b16 %v553, %v550
        %v599 = vpack.c.b16 %v557, %v554
        %v600 = vpack.c.b16 %v558, %v555
        %v601 = vpack.c.b16 %v559, %v556
        %v602 = vpack.c.b16 %v563, %v560
        %v603 = vpack.c.b16 %v564, %v561
        %v604 = vpack.c.b16 %v565, %v562
        %v605 = vpack.c.b16 %v569, %v566
        %v606 = vpack.c.b16 %v570, %v567
        %v607 = vpack.c.b16 %v571, %v568
        %v608 = vpack.c.b16 %v575, %v572
        %v609 = vpack.c.b16 %v576, %v573
        %v610 = vpack.c.b16 %v577, %v574
        %v611 = vpack.c.b16 %v581, %v578
        %v612 = vpack.c.b16 %v582, %v579
        %v613 = vpack.c.b16 %v583, %v580
        %v614 = vpack.c.b16 %v587, %v584
        %v615 = vpack.c.b16 %v588, %v585
        %v616 = vpack.c.b16 %v589, %v586
        %vm641 = vcmask 97280
        %v643 = vsel %vm641, %v495, 0
        %v646 = vsel %vm641, %v497, 0
        %vm648 = vcmask 1045504
        %v650 = vsel %vm648, %v614, 0
        %v653 = vsel %vm648, %v615, 0
        %v656 = vsel %vm648, %v616, 0
        %658 = vmatpush.bf16.msra.mxu0 %v611
        %659 = vmatpush.bf16.msra.mxu0 %v608
        %660 = vmatpush.bf16.msra.mxu0 %v605
        %661 = vmatpush.bf16.msra.mxu0 %v602
        %662 = vmatpush.bf16.msra.mxu0 %v599
        %663 = vmatpush.bf16.msra.mxu0 %v596
        %664 = vmatpush.bf16.msra.mxu0 %v593
        %665 = vmatpush.bf16.msra.mxu0 %v590
        %666 = vmatmul.bf16.gmra.mxu0 %v494
        %v667 = vpop.f32.mrf.mxu0
        %v668 = vadd.f32 %v476, %v667
        %v669 = vpop.f32.mrf.mxu0
        %v670 = vadd.f32 %v476, %v669
        %671 = vmatmul.bf16.gmra.mxu0 %v496
        %v672 = vpop.f32.mrf.mxu0
        %v673 = vadd.f32 %v476, %v672
        %v674 = vpop.f32.mrf.mxu0
        %v675 = vadd.f32 %v476, %v674
        %676 = vdwg.mxu0
        %677 = vmatpush.bf16.msra.mxu0 0
        %678 = vmatpush.bf16.msra.mxu0 0
        %679 = vmatpush.bf16.msra.mxu0 0
        %680 = vmatpush.bf16.msra.mxu0 0
        %681 = vmatpush.bf16.msra.mxu0 0
        %682 = vmatpush.bf16.msra.mxu0 0
        %683 = vmatpush.bf16.msra.mxu0 0
        %684 = vmatpush.bf16.msra.mxu0 %v650
        %685 = vmatmul.bf16.gmra.mxu0 %v643
        %v686 = vpop.f32.mrf.mxu0
        %v687 = vadd.f32 %v668, %v686
        %v688 = vpop.f32.mrf.mxu0
        %v689 = vadd.f32 %v670, %v688
        %690 = vmatmul.bf16.gmra.mxu0 %v646
        %v691 = vpop.f32.mrf.mxu0
        %v692 = vadd.f32 %v673, %v691
        %v693 = vpop.f32.mrf.mxu0
        %v694 = vadd.f32 %v675, %v693
        %695 = vdwg.mxu0
        %696 = vmatpush.bf16.msra.mxu0 %v612
        %697 = vmatpush.bf16.msra.mxu0 %v609
        %698 = vmatpush.bf16.msra.mxu0 %v606
        %699 = vmatpush.bf16.msra.mxu0 %v603
        %700 = vmatpush.bf16.msra.mxu0 %v600
        %701 = vmatpush.bf16.msra.mxu0 %v597
        %702 = vmatpush.bf16.msra.mxu0 %v594
        %703 = vmatpush.bf16.msra.mxu0 %v591
        %704 = vmatmul.bf16.gmra.mxu0 %v494
        %v705 = vpop.f32.mrf.mxu0
        %v706 = vadd.f32 %v477, %v705
        %v707 = vpop.f32.mrf.mxu0
        %v708 = vadd.f32 %v477, %v707
        %709 = vmatmul.bf16.gmra.mxu0 %v496
        %v710 = vpop.f32.mrf.mxu0
        %v711 = vadd.f32 %v477, %v710
        %v712 = vpop.f32.mrf.mxu0
        %v713 = vadd.f32 %v477, %v712
        %714 = vdwg.mxu0
        %715 = vmatpush.bf16.msra.mxu0 0
        %716 = vmatpush.bf16.msra.mxu0 0
        %717 = vmatpush.bf16.msra.mxu0 0
        %718 = vmatpush.bf16.msra.mxu0 0
        %719 = vmatpush.bf16.msra.mxu0 0
        %720 = vmatpush.bf16.msra.mxu0 0
        %721 = vmatpush.bf16.msra.mxu0 0
        %722 = vmatpush.bf16.msra.mxu0 %v653
        %723 = vmatmul.bf16.gmra.mxu0 %v643
        %v724 = vpop.f32.mrf.mxu0
        %v725 = vadd.f32 %v706, %v724
        %v726 = vpop.f32.mrf.mxu0
        %v727 = vadd.f32 %v708, %v726
        %728 = vmatmul.bf16.gmra.mxu0 %v646
        %v729 = vpop.f32.mrf.mxu0
        %v730 = vadd.f32 %v711, %v729
        %v731 = vpop.f32.mrf.mxu0
        %v732 = vadd.f32 %v713, %v731
        %733 = vdwg.mxu0
        %734 = vmatpush.bf16.msra.mxu0 %v613
        %735 = vmatpush.bf16.msra.mxu0 %v610
        %736 = vmatpush.bf16.msra.mxu0 %v607
        %737 = vmatpush.bf16.msra.mxu0 %v604
        %738 = vmatpush.bf16.msra.mxu0 %v601
        %739 = vmatpush.bf16.msra.mxu0 %v598
        %740 = vmatpush.bf16.msra.mxu0 %v595
        %741 = vmatpush.bf16.msra.mxu0 %v592
        %742 = vmatmul.bf16.gmra.mxu0 %v494
        %v743 = vpop.f32.mrf.mxu0
        %v744 = vadd.f32 %v478, %v743
        %v745 = vpop.f32.mrf.mxu0
        %v746 = vadd.f32 %v478, %v745
        %747 = vmatmul.bf16.gmra.mxu0 %v496
        %v748 = vpop.f32.mrf.mxu0
        %v749 = vadd.f32 %v478, %v748
        %v750 = vpop.f32.mrf.mxu0
        %v751 = vadd.f32 %v478, %v750
        %752 = vdwg.mxu0
        %753 = vmatpush.bf16.msra.mxu0 0
        %754 = vmatpush.bf16.msra.mxu0 0
        %755 = vmatpush.bf16.msra.mxu0 0
        %756 = vmatpush.bf16.msra.mxu0 0
        %757 = vmatpush.bf16.msra.mxu0 0
        %758 = vmatpush.bf16.msra.mxu0 0
        %759 = vmatpush.bf16.msra.mxu0 0
        %760 = vmatpush.bf16.msra.mxu0 %v656
        %761 = vmatmul.bf16.gmra.mxu0 %v643
        %v762 = vpop.f32.mrf.mxu0
        %v763 = vadd.f32 %v744, %v762
        %v764 = vpop.f32.mrf.mxu0
        %v765 = vadd.f32 %v746, %v764
        %766 = vmatmul.bf16.gmra.mxu0 %v646
        %v767 = vpop.f32.mrf.mxu0
        %v768 = vadd.f32 %v749, %v767
        %v769 = vpop.f32.mrf.mxu0
        %v770 = vadd.f32 %v751, %v769
        %771 = vdwg.mxu0
        %v772 = vmax.f32 %v763, 0.0
        %v773 = vmax.f32 %v765, 0.0
        %v774 = vmax.f32 %v768, 0.0
        %v775 = vmax.f32 %v770, 0.0
        %v776 = vpack.c.bf16 %v773, %v772
        %v777 = vpack.c.bf16 %v775, %v774
        %v778 = vld [vmem:[#allocation7 + $0xc0] sm:$0xf]
        %v779 = vld [vmem:[#allocation7 + $0xc4] sm:$0xf]
        %v780 = vld [vmem:[#allocation7 + $0xc8] sm:$0xf]
        %v781 = vld [vmem:[#allocation7 + $0xcc] sm:$0xf]
        %v782 = vld [vmem:[#allocation7 + $0xd0] sm:$0xf]
        %v783 = vld [vmem:[#allocation7 + $0xd4] sm:$0xf]
        %v784 = vld [vmem:[#allocation7 + $0xd8] sm:$0xf]
        %v785 = vld [vmem:[#allocation7 + $0xdc] sm:$0xf]
        %v786 = vld [vmem:[#allocation7 + $0xe0] sm:$0xf]
        %v787 = vld [vmem:[#allocation7 + $0xe4] sm:$0xf]
        %v788 = vld [vmem:[#allocation7 + $0xe8] sm:$0xf]
        %v789 = vld [vmem:[#allocation7 + $0xec] sm:$0xf]
        %v790 = vld [vmem:[#allocation7 + $0xf0] sm:$0xf]
        %v791 = vld [vmem:[#allocation7 + $0xf4] sm:$0xf]
        %v792 = vld [vmem:[#allocation7 + $0xf8] sm:$0xf]
        %v793 = vld [vmem:[#allocation7 + $0xfc] sm:$0xf]
        %v794 = vld [vmem:[#allocation10 + $0x11] ss:$0 sm:$0xff]
        %v811 = vunpack.c.l.b16 %v778
        %v812 = vunpack.c.l.b16 %v779
        %v813 = vunpack.c.l.b16 %v780
        %v814 = vunpack.c.l.b16 %v781
        %v815 = vunpack.c.l.b16 %v782
        %v816 = vunpack.c.l.b16 %v783
        %v817 = vunpack.c.l.b16 %v784
        %v818 = vunpack.c.l.b16 %v785
        %v819 = vunpack.c.l.b16 %v786
        %v820 = vunpack.c.l.b16 %v787
        %v821 = vunpack.c.l.b16 %v788
        %v822 = vunpack.c.l.b16 %v789
        %v823 = vunpack.c.l.b16 %v790
        %v824 = vunpack.c.l.b16 %v791
        %v825 = vunpack.c.l.b16 %v792
        %v826 = vunpack.c.l.b16 %v793
        %v827 = vpack.c.b16 %v812, %v811
        %v828 = vpack.c.b16 %v814, %v813
        %v829 = vpack.c.b16 %v816, %v815
        %v830 = vpack.c.b16 %v818, %v817
        %v831 = vpack.c.b16 %v820, %v819
        %v832 = vpack.c.b16 %v822, %v821
        %v833 = vpack.c.b16 %v824, %v823
        %v834 = vpack.c.b16 %v826, %v825
        %843 = vmatpush.bf16.msra.mxu0 %v834
        %844 = vmatpush.bf16.msra.mxu0 %v833
        %845 = vmatpush.bf16.msra.mxu0 %v832
        %846 = vmatpush.bf16.msra.mxu0 %v831
        %847 = vmatpush.bf16.msra.mxu0 %v830
        %848 = vmatpush.bf16.msra.mxu0 %v829
        %849 = vmatpush.bf16.msra.mxu0 %v828
        %850 = vmatpush.bf16.msra.mxu0 %v827
        %851 = vmatmul.bf16.gmra.mxu0 %v776
        %v852 = vpop.f32.mrf.mxu0
        %v853 = vadd.f32 %v794, %v852
        %v854 = vpop.f32.mrf.mxu0
        %v855 = vadd.f32 %v794, %v854
        %856 = vmatmul.bf16.gmra.mxu0 %v777
        %v857 = vpop.f32.mrf.mxu0
        %v858 = vadd.f32 %v794, %v857
        %v859 = vpop.f32.mrf.mxu0
        %v860 = vadd.f32 %v794, %v859
        %861 = vdwg.mxu0
        %v863 = vrot.slane %v431, 1
        %v864 = vrot.slane %v431, 2
        %v865 = vrot.slane %v431, 3
        %v866 = vperm.slane %v431, 0
        %v867 = vperm.slane %v863, 0
        %v868 = vperm.slane %v864, 0
        %v869 = vperm.slane %v865, 0
        %v874 = vsub.f32 %v866, %v687
        %v875 = vsub.f32 %v867, %v689
        %v876 = vsub.f32 %v868, %v692
        %v877 = vsub.f32 %v869, %v694
        %v878 = vadd.f32 %v874, %v853
        %v879 = vadd.f32 %v875, %v855
        %v880 = vadd.f32 %v876, %v858
        %v881 = vadd.f32 %v877, %v860
        %v882 = vpack.c.bf16 %v879, %v878
        %v883 = vpack.c.bf16 %v881, %v880
        %v884 = vld [vmem:[#allocation7 + $0x40] sm:$0xf]
        %v885 = vld [vmem:[#allocation7 + $0x44] sm:$0xf]
        %v886 = vld [vmem:[#allocation7 + $0x48] sm:$0xf]
        %v887 = vld [vmem:[#allocation7 + $0x4c] sm:$0xf]
        %v888 = vld [vmem:[#allocation7 + $0x50] sm:$0xf]
        %v889 = vld [vmem:[#allocation7 + $0x54] sm:$0xf]
        %v890 = vld [vmem:[#allocation7 + $0x58] sm:$0xf]
        %v891 = vld [vmem:[#allocation7 + $0x5c] sm:$0xf]
        %v892 = vld [vmem:[#allocation7 + $0x60] sm:$0xf]
        %v893 = vld [vmem:[#allocation7 + $0x64] sm:$0xf]
        %v894 = vld [vmem:[#allocation7 + $0x68] sm:$0xf]
        %v895 = vld [vmem:[#allocation7 + $0x6c] sm:$0xf]
        %v896 = vld [vmem:[#allocation7 + $0x70] sm:$0xf]
        %v897 = vld [vmem:[#allocation7 + $0x74] sm:$0xf]
        %v898 = vld [vmem:[#allocation7 + $0x78] sm:$0xf]
        %v899 = vld [vmem:[#allocation7 + $0x7c] sm:$0xf]
        %v900 = vld [vmem:[#allocation10 + $0x1] ss:$0 sm:$0xff]
        %v917 = vunpack.c.l.b16 %v884
        %v918 = vunpack.c.l.b16 %v885
        %v919 = vunpack.c.l.b16 %v886
        %v920 = vunpack.c.l.b16 %v887
        %v921 = vunpack.c.l.b16 %v888
        %v922 = vunpack.c.l.b16 %v889
        %v923 = vunpack.c.l.b16 %v890
        %v924 = vunpack.c.l.b16 %v891
        %v925 = vunpack.c.l.b16 %v892
        %v926 = vunpack.c.l.b16 %v893
        %v927 = vunpack.c.l.b16 %v894
        %v928 = vunpack.c.l.b16 %v895
        %v929 = vunpack.c.l.b16 %v896
        %v930 = vunpack.c.l.b16 %v897
        %v931 = vunpack.c.l.b16 %v898
        %v932 = vunpack.c.l.b16 %v899
        %v933 = vpack.c.b16 %v918, %v917
        %v934 = vpack.c.b16 %v920, %v919
        %v935 = vpack.c.b16 %v922, %v921
        %v936 = vpack.c.b16 %v924, %v923
        %v937 = vpack.c.b16 %v926, %v925
        %v938 = vpack.c.b16 %v928, %v927
        %v939 = vpack.c.b16 %v930, %v929
        %v940 = vpack.c.b16 %v932, %v931
        %949 = vmatpush.bf16.msra.mxu0 %v940
        %950 = vmatpush.bf16.msra.mxu0 %v939
        %951 = vmatpush.bf16.msra.mxu0 %v938
        %952 = vmatpush.bf16.msra.mxu0 %v937
        %953 = vmatpush.bf16.msra.mxu0 %v936
        %954 = vmatpush.bf16.msra.mxu0 %v935
        %955 = vmatpush.bf16.msra.mxu0 %v934
        %956 = vmatpush.bf16.msra.mxu0 %v933
        %957 = vmatmul.bf16.gmra.mxu0 %v882
        %v958 = vpop.f32.mrf.mxu0
        %v959 = vadd.f32 %v900, %v958
        %v960 = vpop.f32.mrf.mxu0
        %v961 = vadd.f32 %v900, %v960
        %962 = vmatmul.bf16.gmra.mxu0 %v883
        %v963 = vpop.f32.mrf.mxu0
        %v964 = vadd.f32 %v900, %v963
        %v965 = vpop.f32.mrf.mxu0
        %v966 = vadd.f32 %v900, %v965
        %967 = vdwg.mxu0
        %v968 = vmax.f32 %v959, 0.0
        %v969 = vmax.f32 %v961, 0.0
        %v970 = vmax.f32 %v964, 0.0
        %v971 = vmax.f32 %v966, 0.0
        %v972 = vpack.c.bf16 %v969, %v968
        %v973 = vpack.c.bf16 %v971, %v970
        %v974 = vld [vmem:[#allocation7 + $0x80] sm:$0xf]
        %v975 = vld [vmem:[#allocation7 + $0x84] sm:$0xf]
        %v976 = vld [vmem:[#allocation7 + $0x88] sm:$0xf]
        %v977 = vld [vmem:[#allocation7 + $0x8c] sm:$0xf]
        %v978 = vld [vmem:[#allocation7 + $0x90] sm:$0xf]
        %v979 = vld [vmem:[#allocation7 + $0x94] sm:$0xf]
        %v980 = vld [vmem:[#allocation7 + $0x98] sm:$0xf]
        %v981 = vld [vmem:[#allocation7 + $0x9c] sm:$0xf]
        %v982 = vld [vmem:[#allocation7 + $0xa0] sm:$0xf]
        %v983 = vld [vmem:[#allocation7 + $0xa4] sm:$0xf]
        %v984 = vld [vmem:[#allocation7 + $0xa8] sm:$0xf]
        %v985 = vld [vmem:[#allocation7 + $0xac] sm:$0xf]
        %v986 = vld [vmem:[#allocation7 + $0xb0] sm:$0xf]
        %v987 = vld [vmem:[#allocation7 + $0xb4] sm:$0xf]
        %v988 = vld [vmem:[#allocation7 + $0xb8] sm:$0xf]
        %v989 = vld [vmem:[#allocation7 + $0xbc] sm:$0xf]
        %v990 = vld [vmem:[#allocation10 + $0x9] ss:$0 sm:$0xff]
        %v1007 = vunpack.c.l.b16 %v974
        %v1008 = vunpack.c.l.b16 %v975
        %v1009 = vunpack.c.l.b16 %v976
        %v1010 = vunpack.c.l.b16 %v977
        %v1011 = vunpack.c.l.b16 %v978
        %v1012 = vunpack.c.l.b16 %v979
        %v1013 = vunpack.c.l.b16 %v980
        %v1014 = vunpack.c.l.b16 %v981
        %v1015 = vunpack.c.l.b16 %v982
        %v1016 = vunpack.c.l.b16 %v983
        %v1017 = vunpack.c.l.b16 %v984
        %v1018 = vunpack.c.l.b16 %v985
        %v1019 = vunpack.c.l.b16 %v986
        %v1020 = vunpack.c.l.b16 %v987
        %v1021 = vunpack.c.l.b16 %v988
        %v1022 = vunpack.c.l.b16 %v989
        %v1023 = vpack.c.b16 %v1008, %v1007
        %v1024 = vpack.c.b16 %v1010, %v1009
        %v1025 = vpack.c.b16 %v1012, %v1011
        %v1026 = vpack.c.b16 %v1014, %v1013
        %v1027 = vpack.c.b16 %v1016, %v1015
        %v1028 = vpack.c.b16 %v1018, %v1017
        %v1029 = vpack.c.b16 %v1020, %v1019
        %v1030 = vpack.c.b16 %v1022, %v1021
        %1039 = vmatpush.bf16.msra.mxu0 %v1030
        %1040 = vmatpush.bf16.msra.mxu0 %v1029
        %1041 = vmatpush.bf16.msra.mxu0 %v1028
        %1042 = vmatpush.bf16.msra.mxu0 %v1027
        %1043 = vmatpush.bf16.msra.mxu0 %v1026
        %1044 = vmatpush.bf16.msra.mxu0 %v1025
        %1045 = vmatpush.bf16.msra.mxu0 %v1024
        %1046 = vmatpush.bf16.msra.mxu0 %v1023
        %1047 = vmatmul.bf16.gmra.mxu0 %v972
        %v1048 = vpop.f32.mrf.mxu0
        %v1049 = vadd.f32 %v990, %v1048
        %v1050 = vpop.f32.mrf.mxu0
        %v1051 = vadd.f32 %v990, %v1050
        %1052 = vmatmul.bf16.gmra.mxu0 %v973
        %v1053 = vpop.f32.mrf.mxu0
        %v1054 = vadd.f32 %v990, %v1053
        %v1055 = vpop.f32.mrf.mxu0
        %v1056 = vadd.f32 %v990, %v1055
        %1057 = vdwg.mxu0
        %v1058 = vmul.f32 %v1049, 0.17677669
        %v1059 = vmul.f32 %v1051, 0.17677669
        %v1060 = vmul.f32 %v1054, 0.17677669
        %v1061 = vmul.f32 %v1056, 0.17677669
        %v1062 = vrot.slane %v1058, 4
        %v1063 = vmax.f32 %v1058, %v1062
        %v1064 = vrot.slane %v1063, 2
        %v1065 = vmax.f32 %v1063, %v1064
        %v1066 = vrot.slane %v1065, 1
        %v1067 = vmax.f32 %v1065, %v1066
        %v1068 = vrot.slane %v1059, 4
        %v1069 = vmax.f32 %v1059, %v1068
        %v1070 = vrot.slane %v1069, 2
        %v1071 = vmax.f32 %v1069, %v1070
        %v1072 = vrot.slane %v1071, 1
        %v1073 = vmax.f32 %v1071, %v1072
        %v1074 = vrot.slane %v1060, 4
        %v1075 = vmax.f32 %v1060, %v1074
        %v1076 = vrot.slane %v1075, 2
        %v1077 = vmax.f32 %v1075, %v1076
        %v1078 = vrot.slane %v1077, 1
        %v1079 = vmax.f32 %v1077, %v1078
        %v1080 = vrot.slane %v1061, 4
        %v1081 = vmax.f32 %v1061, %v1080
        %v1082 = vrot.slane %v1081, 2
        %v1083 = vmax.f32 %v1081, %v1082
        %v1084 = vrot.slane %v1083, 1
        %v1085 = vmax.f32 %v1083, %v1084
        %v1086 = vsub.f32 %v1058, %v1067
        %v1087 = vsub.f32 %v1059, %v1073
        %v1088 = vsub.f32 %v1060, %v1079
        %v1089 = vsub.f32 %v1061, %v1085
        %v1090 = vmul.f32 %v1086, 1.442695
        %v1091 = vpow.pop %v1090
        %v1092 = vmul.f32 %v1087, 1.442695
        %v1093 = vpow.pop %v1092
        %v1094 = vmul.f32 %v1088, 1.442695
        %v1095 = vpow.pop %v1094
        %v1096 = vmul.f32 %v1089, 1.442695
        %v1097 = vpow.pop %v1096
        %v1098 = vrot.slane %v1091, 4
        %v1099 = vadd.f32 %v1091, %v1098
        %v1100 = vrot.slane %v1099, 2
        %v1101 = vadd.f32 %v1099, %v1100
        %v1102 = vrot.slane %v1101, 1
        %v1103 = vadd.f32 %v1101, %v1102
        %v1104 = vrot.slane %v1093, 4
        %v1105 = vadd.f32 %v1093, %v1104
        %v1106 = vrot.slane %v1105, 2
        %v1107 = vadd.f32 %v1105, %v1106
        %v1108 = vrot.slane %v1107, 1
        %v1109 = vadd.f32 %v1107, %v1108
        %v1110 = vrot.slane %v1095, 4
        %v1111 = vadd.f32 %v1095, %v1110
        %v1112 = vrot.slane %v1111, 2
        %v1113 = vadd.f32 %v1111, %v1112
        %v1114 = vrot.slane %v1113, 1
        %v1115 = vadd.f32 %v1113, %v1114
        %v1116 = vrot.slane %v1097, 4
        %v1117 = vadd.f32 %v1097, %v1116
        %v1118 = vrot.slane %v1117, 2
        %v1119 = vadd.f32 %v1117, %v1118
        %v1120 = vrot.slane %v1119, 1
        %v1121 = vadd.f32 %v1119, %v1120
        %v1122 = vrcp.pop %v1103
        %v1123 = vrcp.pop %v1109
        %v1124 = vrcp.pop %v1115
        %v1125 = vrcp.pop %v1121
        %v1126 = vmul.f32 %v1091, %v1122
        %v1127 = vmul.f32 %v1093, %v1123
        %v1128 = vmul.f32 %v1095, %v1124
        %v1129 = vmul.f32 %v1097, %v1125
        %v1130 = vadd.f32 %v725, %v853
        %v1131 = vadd.f32 %v727, %v855
        %v1132 = vadd.f32 %v730, %v858
        %v1133 = vadd.f32 %v732, %v860
        %v1134 = vmul.f32 %v1126, %v1130
        %v1135 = vmul.f32 %v1127, %v1131
        %v1136 = vmul.f32 %v1128, %v1132
        %v1137 = vmul.f32 %v1129, %v1133
        %v1138 = vrot.slane %v1134, 4
        %v1139 = vadd.f32 %v1134, %v1138
        %v1140 = vrot.slane %v1139, 2
        %v1141 = vadd.f32 %v1139, %v1140
        %v1142 = vrot.slane %v1141, 1
        %v1143 = vadd.f32 %v1141, %v1142
        %v1144 = vrot.slane %v1135, 4
        %v1145 = vadd.f32 %v1135, %v1144
        %v1146 = vrot.slane %v1145, 2
        %v1147 = vadd.f32 %v1145, %v1146
        %v1148 = vrot.slane %v1147, 1
        %v1149 = vadd.f32 %v1147, %v1148
        %v1150 = vrot.slane %v1136, 4
        %v1151 = vadd.f32 %v1136, %v1150
        %v1152 = vrot.slane %v1151, 2
        %v1153 = vadd.f32 %v1151, %v1152
        %v1154 = vrot.slane %v1153, 1
        %v1155 = vadd.f32 %v1153, %v1154
        %v1156 = vrot.slane %v1137, 4
        %v1157 = vadd.f32 %v1137, %v1156
        %v1158 = vrot.slane %v1157, 2
        %v1159 = vadd.f32 %v1157, %v1158
        %v1160 = vrot.slane %v1159, 1
        %v1161 = vadd.f32 %v1159, %v1160
        %v1162 = vpack.c.bf16 %v1143, %v1143
        %v1163 = vpack.c.bf16 %v1149, %v1149
        %v1164 = vpack.c.bf16 %v1155, %v1155
        %v1165 = vpack.c.bf16 %v1161, %v1161
        %v1166 = vld [vmem:[#allocation7 + $0x100] sm:$0xf]
        %v1167 = vld [vmem:[#allocation7 + $0x104] sm:$0xf]
        %v1168 = vld [vmem:[#allocation7 + $0x108] sm:$0xf]
        %v1169 = vld [vmem:[#allocation7 + $0x10c] sm:$0xf]
        %v1170 = vld [vmem:[#allocation7 + $0x110] sm:$0xf]
        %v1171 = vld [vmem:[#allocation7 + $0x114] sm:$0xf]
        %v1172 = vld [vmem:[#allocation7 + $0x118] sm:$0xf]
        %v1173 = vld [vmem:[#allocation7 + $0x11c] sm:$0xf]
        %v1174 = vld [vmem:[#allocation7 + $0x120] sm:$0xf]
        %v1175 = vld [vmem:[#allocation7 + $0x124] sm:$0xf]
        %v1176 = vld [vmem:[#allocation7 + $0x128] sm:$0xf]
        %v1177 = vld [vmem:[#allocation7 + $0x12c] sm:$0xf]
        %v1178 = vld [vmem:[#allocation7 + $0x130] sm:$0xf]
        %v1179 = vld [vmem:[#allocation7 + $0x134] sm:$0xf]
        %v1180 = vld [vmem:[#allocation7 + $0x138] sm:$0xf]
        %v1181 = vld [vmem:[#allocation7 + $0x13c] sm:$0xf]
        %v1182 = vld [vmem:[#allocation10 + $0x2] ss:$0 sm:$0xff]
        %v1187 = vunpack.c.l.b16 %v1162
        %v1188 = vunpack.c.l.b16 %v1163
        %v1189 = vunpack.c.l.b16 %v1164
        %v1190 = vunpack.c.l.b16 %v1165
        %vm1191 = vcmask 1041409
        %v1192 = vsel %vm1191, %v1188, %v1187
        %vm1193 = vcmask 1042434
        %v1194 = vsel %vm1193, %v1189, %v1192
        %vm1195 = vcmask 1043459
        %v1196 = vsel %vm1195, %v1190, %v1194
        %v1197 = vpack.c.b16 %v1196, %v1196
        %v1215 = vunpack.c.l.b16 %v1166
        %v1216 = vunpack.c.l.b16 %v1167
        %v1217 = vunpack.c.l.b16 %v1168
        %v1218 = vunpack.c.l.b16 %v1169
        %v1219 = vunpack.c.l.b16 %v1170
        %v1220 = vunpack.c.l.b16 %v1171
        %v1221 = vunpack.c.l.b16 %v1172
        %v1222 = vunpack.c.l.b16 %v1173
        %v1223 = vunpack.c.l.b16 %v1174
        %v1224 = vunpack.c.l.b16 %v1175
        %v1225 = vunpack.c.l.b16 %v1176
        %v1226 = vunpack.c.l.b16 %v1177
        %v1227 = vunpack.c.l.b16 %v1178
        %v1228 = vunpack.c.l.b16 %v1179
        %v1229 = vunpack.c.l.b16 %v1180
        %v1230 = vunpack.c.l.b16 %v1181
        %v1231 = vpack.c.b16 %v1216, %v1215
        %v1232 = vpack.c.b16 %v1218, %v1217
        %v1233 = vpack.c.b16 %v1220, %v1219
        %v1234 = vpack.c.b16 %v1222, %v1221
        %v1235 = vpack.c.b16 %v1224, %v1223
        %v1236 = vpack.c.b16 %v1226, %v1225
        %v1237 = vpack.c.b16 %v1228, %v1227
        %v1238 = vpack.c.b16 %v1230, %v1229
        %1247 = vmatpush.bf16.msra.mxu0 %v1238
        %1248 = vmatpush.bf16.msra.mxu0 %v1237
        %1249 = vmatpush.bf16.msra.mxu0 %v1236
        %1250 = vmatpush.bf16.msra.mxu0 %v1235
        %1251 = vmatpush.bf16.msra.mxu0 %v1234
        %1252 = vmatpush.bf16.msra.mxu0 %v1233
        %1253 = vmatpush.bf16.msra.mxu0 %v1232
        %1254 = vmatpush.bf16.msra.mxu0 %v1231
        %1255 = vmatmul.bf16.gmra.mxu0 %v1197
        %v1256 = vpop.f32.mrf.mxu0
        %v1257 = vadd.f32 %v1182, %v1256
        %v1258 = vpop.f32.mrf.mxu0
        %1259 = vdwg.mxu0
        %v1260 = vadd.f32 %v1257, %v355
        %1261 = vst [vmem:[%s352] sm:$0xf] %v1260
        %s1262 = sand.u32 %s167, 1
        %s1263 = scalar_lea.sflag [#allocation4], %s1262
        %s1264 = sand.u32 %s167, 1
        %s1265 = smul.addr %s1264, 4
        %s1266 = scalar_lea.vmem [#allocation11], %s1265
        // Predicated region
        $region61: #{tpu_custom_call.1} parent=39 // pred_check
          %p1267 = pneg %p177
        $region62: #{tpu_custom_call.1} parent=39 // pred_check_branch
          %1269 = sbr.rel (%p1267) target = $region64
        $region63: #{tpu_custom_call.1} parent=39 // pred_region
          %1271 = vsyncadd %s1263, 0
          %s1272 = sadd.s32 %s31, %s30
          %s1273 = smul.addr %s1272, 4
          %s1274 = scalar_lea.hbm %s5, %s1273
          %s1276 = sshll.u32 %s1266, 4
          %s1277 = int_to_ptr.vmem [resolvable:$true] %s1276
          %s1278 = sshll.u32 %s1274, 4
          %s1279 = int_to_ptr.hbm [resolvable:$true] %s1278
          %1281 = dma.vmem_to_hbm [thread:$0]  %s1277, 64, %s1279, %s1263
        $region64: #{tpu_custom_call.1} parent=39 // pred_fallthru
          _
      $region40: #{tpu_custom_call.1} parent=5 // pred_fallthru
        _
      %p1282 = scmp.le.s32.totalorder 2, %s21
      // Predicated region
      $region65: #{tpu_custom_call.1} parent=5 // pred_check
        %p1283 = pneg %p1282
      $region66: #{tpu_custom_call.1} parent=5 // pred_check_branch
        %1285 = sbr.rel (%p1283) target = $region68
      $region67: #{tpu_custom_call.1} parent=5 // pred_region
        %s1286 = ssub.s32 %s21, 2
        // Predicated region
        $region69: #{tpu_custom_call.1} parent=67 // pred_check
          %p1287 = pneg %p183
        $region70: #{tpu_custom_call.1} parent=67 // pred_check_branch
          %1289 = sbr.rel (%p1287) target = $region72
        $region71: #{tpu_custom_call.1} parent=67 // pred_region
          %s1290 = sand.u32 %s168, 1
          %s1291 = scalar_lea.sflag [#allocation4], %s1290
          %s1292 = sand.u32 %s168, 1
          %s1293 = smul.addr %s1292, 4
          %s1294 = scalar_lea.vmem [#allocation11], %s1293
          %1296 = dma.done %s1291, 64
        $region72: #{tpu_custom_call.1} parent=67 // pred_fallthru
          _
      $region68: #{tpu_custom_call.1} parent=5 // pred_fallthru
        _
    $region6: #{tpu_custom_call.1} parent=1 // loop_footer
      %s25 = sadd.s32 1, %s21
    $region7: #{tpu_custom_call.1} parent=1 // loop_footer_branch
      %20 = sbr.rel target = $region3
    $region8: #{tpu_custom_call.1} parent=1 // loop_exit
      _
    %1297 = vsyncpa [#allocation3], 1
    %s1298 = scalar_lea.sflag [#allocation3], 1
    %1299 = vsyncpa %s1298, 1
    %1300 = vsyncpa [#allocation6], 1
    %s1301 = scalar_lea.sflag [#allocation6], 1
    %1302 = vsyncpa %s1301, 1
    %1303 = vsyncpa [#allocation9], 1
    %1304 = vsyncpa [#allocation4], 1
    %s1305 = scalar_lea.sflag [#allocation4], 1
    %1306 = vsyncpa %s1305, 1

</llo_original>
